<compile_context>
chip_gen: v5e
topology: v5e:2x2
jax: 0.10.0
libtpu: 0.0.40
codegen_flags: <defaults>
</compile_context>

<pallas_src>
import functools

import jax
import jax.numpy as jnp
from jax import lax
from jax.experimental import pallas as pl
from jax.experimental.pallas import tpu as pltpu

TEMPERATURE = 0.5
EPS = 1e-8
NORM_EPS = 1e-12  # F.normalize clamps the norm at this value


def _round_up(x, m):
    return (x + m - 1) // m * m


def _pick_norm_block(n_pad, d):
    """Row block for kernel 1: as large as possible while staying VMEM-friendly."""
    budget = 16 * 1024 * 1024  # ~f32 in + 2x bf16 out, double-buffered
    for cand in (1024, 512, 256, 128):
        if n_pad % cand == 0 and cand * d * 16 <= budget:
            return cand
    return 128


def _pick_tiles(n_pad, tq_max=512):
    """Decoupled (TQ, TK) for kernel 2. n_pad is a multiple of 128.

    TK streams from HBM (smaller), TQ stays resident (larger). tq_max=512 is a
    safe default for v7x's 64 MiB VMEM; use tq_max=1024 on v6e (128 MiB).
    """
    tk = 256 if n_pad % 256 == 0 else 128
    tq = tk
    for cand in (tq_max, tq_max // 2, 256, 128):
        if cand >= tk and cand % tk == 0 and n_pad % cand == 0:
            tq = cand
            break
    # Keep >= 2 q tiles when possible so the "parallel" axis can split across
    # both TensorCores on v7x.
    if n_pad // tq == 1 and tq >= 2 * tk:
        tq //= 2
    return tq, tk


# ---------------------------------------------------------------------------
# Kernel 1: L2-normalize rows (f32) -> bf16 (normalized, normalized * 1/T)
# ---------------------------------------------------------------------------
def _normalize_kernel(inv_temp, f_ref, ok_ref, oq_ref):
    x = f_ref[...].astype(jnp.float32)                        # (TR, D)
    ss = jnp.sum(x * x, axis=1, keepdims=True)                # (TR, 1)
    inv = lax.rsqrt(jnp.maximum(ss, NORM_EPS * NORM_EPS))     # 1/max(||x||, eps)
    xn = x * inv
    ok_ref[...] = xn.astype(ok_ref.dtype)                     # k-side features
    oq_ref[...] = (xn * inv_temp).astype(oq_ref.dtype)        # q-side, pre-scaled


def _normalize_rows(features_pad, inv_temp):
    n_pad, d = features_pad.shape
    blk = _pick_norm_block(n_pad, d)
    return pl.pallas_call(
        functools.partial(_normalize_kernel, inv_temp),
        out_shape=(jax.ShapeDtypeStruct((n_pad, d), jnp.bfloat16),
                   jax.ShapeDtypeStruct((n_pad, d), jnp.bfloat16)),
        grid=(n_pad // blk,),
        in_specs=[pl.BlockSpec((blk, d), lambda i: (i, 0))],
        out_specs=(pl.BlockSpec((blk, d), lambda i: (i, 0)),
                   pl.BlockSpec((blk, d), lambda i: (i, 0))),
        compiler_params=pltpu.CompilerParams(
            dimension_semantics=("parallel",)),
    )(features_pad)


# ---------------------------------------------------------------------------
# Kernel 2: tiled similarity + InfoNCE per-row loss (skewed MXU/EUP pipeline)
# ---------------------------------------------------------------------------
def _infonce_tile_kernel(n_valid, eps,
                         fq_ref, fk_ref, labq_ref, labk_ref,
                         loss_ref,
                         pos_acc, neg_acc, sim_a, sim_b, lab_a, lab_b):
    qi = pl.program_id(0)
    ki = pl.program_id(1)
    nk = pl.num_programs(1)
    tq = fq_ref.shape[0]
    tk = fk_ref.shape[0]

    @pl.when(ki == 0)
    def _init():
        pos_acc[...] = jnp.zeros_like(pos_acc)
        neg_acc[...] = jnp.zeros_like(neg_acc)

    even = lax.rem(ki, 2) == 0

    def stage(sim_ref, lab_ref):
        # MXU: (TQ, TK) similarity; q features are pre-scaled by 1/T, so the
        # result is already sim / temperature. bf16 in, f32 accumulate,
        # contraction on the last dim of both operands (A @ B^T, no copy).
        sim_ref[...] = lax.dot_general(
            fq_ref[...], fk_ref[...],
            dimension_numbers=(((1,), (1,)), ((), ())),
            preferred_element_type=jnp.float32)
        lab_ref[...] = labk_ref[...]

    def process(sim_ref, lab_ref, kcol):
        # EUP (exp) + VPU (masks) + XLU (row reductions) for one staged tile.
        e = jnp.exp(sim_ref[...])                              # (TQ, TK)
        same = labq_ref[...] == lab_ref[...]                   # (TQ,1)==(1,TK)
        col = kcol * tk + lax.broadcasted_iota(jnp.int32, (1, tk), 1)
        valid = col < n_valid                                  # drop padded cols
        diff = (lax.broadcasted_iota(jnp.int32, (tq, tk), 0)
                - lax.broadcasted_iota(jnp.int32, (tq, tk), 1))
        not_diag = diff != (kcol * tk - qi * tq)               # global diagonal
        pos_mask = same & valid & not_diag
        neg_mask = jnp.logical_not(same) & valid
        pos_acc[...] += jnp.sum(jnp.where(pos_mask, e, 0.0),
                                axis=1, keepdims=True)
        neg_acc[...] += jnp.sum(jnp.where(neg_mask, e, 0.0),
                                axis=1, keepdims=True)

    # Skew: stage this step's matmul into one buffer while processing the
    # previous step's buffer -> matmul and exp are data-independent in the
    # body and can overlap. Static (distinct) scratch refs per parity keep the
    # scheduler free of aliasing hazards.
    @pl.when(even)
    def _even_step():
        stage(sim_a, lab_a)

        @pl.when(ki > 0)
        def _():
            process(sim_b, lab_b, ki - 1)

    @pl.when(jnp.logical_not(even))
    def _odd_step():
        stage(sim_b, lab_b)
        process(sim_a, lab_a, ki - 1)

    # Epilogue: last k step also drains the buffer it just staged, then emits
    # the per-row loss for this q tile.
    @pl.when(ki == nk - 1)
    def _finalize():
        @pl.when(even)
        def _():
            process(sim_a, lab_a, ki)

        @pl.when(jnp.logical_not(even))
        def _():
            process(sim_b, lab_b, ki)

        sp = pos_acc[...]
        sn = neg_acc[...] + eps
        loss_ref[...] = -jnp.log(sp / (sp + sn) + eps)


def infonce_loss(features, labels, *, temperature=TEMPERATURE, eps=EPS,
                 tq_max=512):
    """features: (N, D) float, labels: (N,) int -> scalar float32 loss.

    tq_max: resident q-tile cap. 512 is safe everywhere (v7x 64 MiB VMEM);
    1024 is recommended on v6e (128 MiB VMEM).
    """
    n, d = features.shape
    n_pad = _round_up(n, 128)          # minimal alignment padding only
    tq, tk = _pick_tiles(n_pad, tq_max)
    num_q = n_pad // tq
    num_k = n_pad // tk

    # Pad in the input dtype (kernel 1 upcasts internally) - no wrapper f32 copy.
    f_pad = jnp.pad(features, ((0, n_pad - n), (0, 0)))
    lab = labels.reshape(-1).astype(jnp.int32)
    lab_pad = jnp.pad(lab, (0, n_pad - n), constant_values=-1)
    lab_col = lab_pad.reshape(n_pad, 1)     # (N_pad, 1) for q rows
    lab_row = lab_pad.reshape(1, n_pad)     # (1, N_pad) lane-dense for k cols

    # (N_pad, D) bf16: normalized (k side) and normalized * 1/T (q side).
    fk_bf16, fq_bf16 = _normalize_rows(f_pad, 1.0 / temperature)

    kernel = functools.partial(_infonce_tile_kernel, n, eps)

    cost = pl.CostEstimate(
        flops=2 * n_pad * n_pad * d,
        transcendentals=n_pad * n_pad,
        bytes_accessed=(num_q + 1) * n_pad * d * 2 + n_pad * 12)

    per_row = pl.pallas_call(
        kernel,
        out_shape=jax.ShapeDtypeStruct((n_pad, 1), jnp.float32),
        grid_spec=pltpu.PrefetchScalarGridSpec(
            num_scalar_prefetch=0,
            grid=(num_q, num_k),
            in_specs=[
                pl.BlockSpec((tq, d), lambda i, k: (i, 0)),   # q features (x 1/T)
                pl.BlockSpec((tk, d), lambda i, k: (k, 0)),   # k features (stream)
                pl.BlockSpec((tq, 1), lambda i, k: (i, 0)),   # q labels (column)
                pl.BlockSpec((1, tk), lambda i, k: (0, k)),   # k labels (row)
            ],
            out_specs=pl.BlockSpec((tq, 1), lambda i, k: (i, 0)),
            scratch_shapes=[
                pltpu.VMEM((tq, 1), jnp.float32),    # sum_pos accumulator
                pltpu.VMEM((tq, 1), jnp.float32),    # sum_neg accumulator
                pltpu.VMEM((tq, tk), jnp.float32),   # sim buffer A (skew)
                pltpu.VMEM((tq, tk), jnp.float32),   # sim buffer B (skew)
                pltpu.VMEM((1, tk), jnp.int32),      # k-label buffer A
                pltpu.VMEM((1, tk), jnp.int32),      # k-label buffer B
            ]),
        compiler_params=pltpu.CompilerParams(
            dimension_semantics=("parallel", "arbitrary"),
            vmem_limit_bytes=40 * 1024 * 1024),
        cost_estimate=cost,
    )(fq_bf16, fk_bf16, lab_col, lab_row)

    # Final mean over the real (unpadded) rows in the JAX wrapper.
    return jnp.mean(per_row[:n, 0])


# ---------------------------------------------------------------------------
# Pure-JAX reference (mirrors the kernel's bf16-into-MXU precision path)
# ---------------------------------------------------------------------------
def infonce_ref(features, labels, temperature=TEMPERATURE, eps=EPS):
    f = features.astype(jnp.float32)
    ss = jnp.sum(f * f, axis=1, keepdims=True)
    inv = lax.rsqrt(jnp.maximum(ss, NORM_EPS * NORM_EPS))
    fk = (f * inv).astype(jnp.bfloat16)
    fq = (f * inv * (1.0 / temperature)).astype(jnp.bfloat16)
    sim = jnp.dot(fq, fk.T, preferred_element_type=jnp.float32)  # already / T
    lab = labels.reshape(-1, 1)
    pos = lab == lab.T
    eye = jnp.eye(f.shape[0], dtype=bool)
    exp_logits = jnp.exp(sim)
    sum_pos = jnp.sum(jnp.where(pos & ~eye, exp_logits, 0.0),
                      axis=1, keepdims=True)
    sum_neg = jnp.sum(jnp.where(~pos, exp_logits, 0.0),
                      axis=1, keepdims=True) + eps
    loss = -jnp.log(sum_pos / (sum_pos + sum_neg) + eps)
    return jnp.mean(loss)


if __name__ == "__main__":
    # Small case (matches the module's toy usage): 8 samples, 32-dim features.
    kf, kl = jax.random.split(jax.random.PRNGKey(0))
    N, D = 8, 32
    features = jax.random.normal(kf, (N, D), dtype=jnp.float32)
    labels = jax.random.randint(kl, (N,), 0, 3, dtype=jnp.int32)

    loss = jax.block_until_ready(infonce_loss(features, labels))
    ref = jax.block_until_ready(infonce_ref(features, labels))
    assert jnp.allclose(loss, ref, rtol=1e-3, atol=1e-3), (loss, ref)

    # Multi-tile case: N=1000 pads to 1024 -> TQ=512, TK=256, grid (2, 4);
    # exercises padding masks, decoupled q/k tiles and the skewed pipeline.
    kf2, kl2 = jax.random.split(jax.random.PRNGKey(1))
    N2, D2 = 1000, 64
    features2 = jax.random.normal(kf2, (N2, D2), dtype=jnp.float32)
    labels2 = jax.random.randint(kl2, (N2,), 0, 7, dtype=jnp.int32)

    loss2 = jax.block_until_ready(infonce_loss(features2, labels2))
    ref2 = jax.block_until_ready(infonce_ref(features2, labels2))
    assert jnp.allclose(loss2, ref2, rtol=1e-3, atol=1e-3), (loss2, ref2)

    print("KERNEL_OK")
</pallas_src>

<mosaic_0001>
module attributes {stable_mosaic.version = 11 : i64} {
  func.func @_normalize_kernel(%arg0: i32, %arg1: memref<128x32xf32, #tpu.memory_space<vmem>>, %arg2: memref<128x32xbf16, #tpu.memory_space<vmem>>, %arg3: memref<128x32xbf16, #tpu.memory_space<vmem>>) attributes {dimension_semantics = [#tpu.dimension_semantics<parallel>], iteration_bounds = array<i64: 1>, scalar_prefetch = 0 : i64, scratch_operands = 0 : i64, tpu.core_type = #tpu.core_type<tc>, window_params = [{transform_indices = @transform_0, window_bounds = array<i64: 128, 32>}, {transform_indices = @transform_1, window_bounds = array<i64: 128, 32>}, {transform_indices = @transform_2, window_bounds = array<i64: 128, 32>}]} {
    %c0 = arith.constant 0 : index
    %c0_0 = arith.constant 0 : index
    %0 = vector.load %arg1[%c0, %c0_0] : memref<128x32xf32, #tpu.memory_space<vmem>>, vector<128x32xf32>
    %1 = arith.mulf %0, %0 : vector<128x32xf32>
    %cst = arith.constant dense<0.000000e+00> : vector<128xf32>
    %2 = vector.multi_reduction <add>, %1, %cst [1] : vector<128x32xf32> to vector<128xf32>
    %3 = vector.shape_cast %2 : vector<128xf32> to vector<128x1xf32>
    %cst_1 = arith.constant 1.000000e-24 : f32
    %4 = vector.broadcast %cst_1 : f32 to vector<128x1xf32>
    %5 = arith.maximumf %3, %4 : vector<128x1xf32>
    %6 = math.rsqrt %5 : vector<128x1xf32>
    %7 = vector.broadcast %6 : vector<128x1xf32> to vector<128x32xf32>
    %8 = arith.mulf %0, %7 : vector<128x32xf32>
    %9 = arith.truncf %8 : vector<128x32xf32> to vector<128x32xbf16>
    %c0_2 = arith.constant 0 : index
    %c0_3 = arith.constant 0 : index
    %10 = vector.load %arg2[%c0_2, %c0_3] : memref<128x32xbf16, #tpu.memory_space<vmem>>, vector<128x32xbf16>
    tpu.vector_store %arg2[%c0_2, %c0_3], %9 {strides = array<i32>} : memref<128x32xbf16, #tpu.memory_space<vmem>>, vector<128x32xbf16>,
    %cst_4 = arith.constant 2.000000e+00 : f32
    %11 = vector.broadcast %cst_4 : f32 to vector<128x32xf32>
    %12 = arith.mulf %8, %11 : vector<128x32xf32>
    %13 = arith.truncf %12 : vector<128x32xf32> to vector<128x32xbf16>
    %c0_5 = arith.constant 0 : index
    %c0_6 = arith.constant 0 : index
    %14 = vector.load %arg3[%c0_5, %c0_6] : memref<128x32xbf16, #tpu.memory_space<vmem>>, vector<128x32xbf16>
    tpu.vector_store %arg3[%c0_5, %c0_6], %13 {strides = array<i32>} : memref<128x32xbf16, #tpu.memory_space<vmem>>, vector<128x32xbf16>,
    return
  }
  func.func @transform_0(%arg0: i32) -> (i32, i32) {
    %c0_i32 = arith.constant 0 : i32
    %c0_i32_0 = arith.constant 0 : i32
    return %arg0, %c0_i32 : i32, i32
  }
  func.func @transform_1(%arg0: i32) -> (i32, i32) {
    %c0_i32 = arith.constant 0 : i32
    %c0_i32_0 = arith.constant 0 : i32
    return %arg0, %c0_i32 : i32, i32
  }
  func.func @transform_2(%arg0: i32) -> (i32, i32) {
    %c0_i32 = arith.constant 0 : i32
    %c0_i32_0 = arith.constant 0 : i32
    return %arg0, %c0_i32 : i32, i32
  }
}

</mosaic_0001>

<llo_original>
// kernel: tpu_custom_call.1
$region0: #{tpu_custom_call.1}
  #allocation0 [shape = 'u32[]', space=smem, size = 0x4, offset = 0x4, fixed_abs, tag = 'smem constant byte address 0x4 - core index']
  #allocation1 [shape = 'u32[72,128]{1,0:T(1,128)}', space=vmem, size = 0x9000, scoped, tag = 'internal scratch']
  %s0 = inlined_call_operand.vmem [shape: f32[128,32], index: 0, kind: input, shape index: {}]
  %s1 = inlined_call_operand.vmem [shape: bf16[128,32], index: 1, kind: output, shape index: {0}]
  %s2 = inlined_call_operand.vmem [shape: bf16[128,32], index: 2, kind: output, shape index: {1}]
  %3 = xla_tuple %s1, %s2
  %s4 = sld [smem:[#allocation0]]
  $region22: #{tpu_custom_call.1} parent=0
    _
  %s6 = ssub.s32 1, %s4
  %s7 = scalar_select 0, %s6, %s4
  // Predicated region
  $region2: #{tpu_custom_call.1} parent=0 // pred_check
    _
  $region3: #{tpu_custom_call.1} parent=0 // pred_check_branch
    %9 = sbr.rel (0) target = $region5
  $region4: #{tpu_custom_call.1} parent=0 // pred_region
    _
  $region5: #{tpu_custom_call.1} parent=0 // pred_fallthru
    _
  %v10 = vld [vmem:[%s0] sm:$0xff]
  %v11 = vld [vmem:[%s0 + $0x8] sm:$0xff]
  %v12 = vld [vmem:[%s0 + $0x10] sm:$0xff]
  %v13 = vld [vmem:[%s0 + $0x18] sm:$0xff]
  %v14 = vld [vmem:[%s0 + $0x20] sm:$0xff]
  %v15 = vld [vmem:[%s0 + $0x28] sm:$0xff]
  %v16 = vld [vmem:[%s0 + $0x30] sm:$0xff]
  %v17 = vld [vmem:[%s0 + $0x38] sm:$0xff]
  %v18 = vld [vmem:[%s0 + $0x40] sm:$0xff]
  %v19 = vld [vmem:[%s0 + $0x48] sm:$0xff]
  %v20 = vld [vmem:[%s0 + $0x50] sm:$0xff]
  %v21 = vld [vmem:[%s0 + $0x58] sm:$0xff]
  %v22 = vld [vmem:[%s0 + $0x60] sm:$0xff]
  %v23 = vld [vmem:[%s0 + $0x68] sm:$0xff]
  %v24 = vld [vmem:[%s0 + $0x70] sm:$0xff]
  %v25 = vld [vmem:[%s0 + $0x78] sm:$0xff]
  %v26 = vmul.f32 %v10, %v10
  %v27 = vmul.f32 %v11, %v11
  %v28 = vmul.f32 %v12, %v12
  %v29 = vmul.f32 %v13, %v13
  %v30 = vmul.f32 %v14, %v14
  %v31 = vmul.f32 %v15, %v15
  %v32 = vmul.f32 %v16, %v16
  %v33 = vmul.f32 %v17, %v17
  %v34 = vmul.f32 %v18, %v18
  %v35 = vmul.f32 %v19, %v19
  %v36 = vmul.f32 %v20, %v20
  %v37 = vmul.f32 %v21, %v21
  %v38 = vmul.f32 %v22, %v22
  %v39 = vmul.f32 %v23, %v23
  %v40 = vmul.f32 %v24, %v24
  %v41 = vmul.f32 %v25, %v25
  %vm42 = vcmask 261120
  %v43 = vsel %vm42, %v26, 0.0
  %44 = vadd.xlane.f32.xlu0 %v43
  %v45 = vpop.xlane.xlu0 %44
  %v46 = vsel %vm42, %v27, 0.0
  %47 = vadd.xlane.f32.xlu0 %v46
  %v48 = vpop.xlane.xlu0 %47
  %v49 = vsel %vm42, %v28, 0.0
  %50 = vadd.xlane.f32.xlu0 %v49
  %v51 = vpop.xlane.xlu0 %50
  %v52 = vsel %vm42, %v29, 0.0
  %53 = vadd.xlane.f32.xlu0 %v52
  %v54 = vpop.xlane.xlu0 %53
  %v55 = vsel %vm42, %v30, 0.0
  %56 = vadd.xlane.f32.xlu0 %v55
  %v57 = vpop.xlane.xlu0 %56
  %v58 = vsel %vm42, %v31, 0.0
  %59 = vadd.xlane.f32.xlu0 %v58
  %v60 = vpop.xlane.xlu0 %59
  %v61 = vsel %vm42, %v32, 0.0
  %62 = vadd.xlane.f32.xlu0 %v61
  %v63 = vpop.xlane.xlu0 %62
  %v64 = vsel %vm42, %v33, 0.0
  %65 = vadd.xlane.f32.xlu0 %v64
  %v66 = vpop.xlane.xlu0 %65
  %v67 = vsel %vm42, %v34, 0.0
  %68 = vadd.xlane.f32.xlu0 %v67
  %v69 = vpop.xlane.xlu0 %68
  %v70 = vsel %vm42, %v35, 0.0
  %71 = vadd.xlane.f32.xlu0 %v70
  %v72 = vpop.xlane.xlu0 %71
  %v73 = vsel %vm42, %v36, 0.0
  %74 = vadd.xlane.f32.xlu0 %v73
  %v75 = vpop.xlane.xlu0 %74
  %v76 = vsel %vm42, %v37, 0.0
  %77 = vadd.xlane.f32.xlu0 %v76
  %v78 = vpop.xlane.xlu0 %77
  %v79 = vsel %vm42, %v38, 0.0
  %80 = vadd.xlane.f32.xlu0 %v79
  %v81 = vpop.xlane.xlu0 %80
  %v82 = vsel %vm42, %v39, 0.0
  %83 = vadd.xlane.f32.xlu0 %v82
  %v84 = vpop.xlane.xlu0 %83
  %v85 = vsel %vm42, %v40, 0.0
  %86 = vadd.xlane.f32.xlu0 %v85
  %v87 = vpop.xlane.xlu0 %86
  %v88 = vsel %vm42, %v41, 0.0
  %89 = vadd.xlane.f32.xlu0 %v88
  %v90 = vpop.xlane.xlu0 %89
  %v91 = vmax.f32 %v45, 1e-24
  %v92 = vmax.f32 %v48, 1e-24
  %v93 = vmax.f32 %v51, 1e-24
  %v94 = vmax.f32 %v54, 1e-24
  %v95 = vmax.f32 %v57, 1e-24
  %v96 = vmax.f32 %v60, 1e-24
  %v97 = vmax.f32 %v63, 1e-24
  %v98 = vmax.f32 %v66, 1e-24
  %v99 = vmax.f32 %v69, 1e-24
  %v100 = vmax.f32 %v72, 1e-24
  %v101 = vmax.f32 %v75, 1e-24
  %v102 = vmax.f32 %v78, 1e-24
  %v103 = vmax.f32 %v81, 1e-24
  %v104 = vmax.f32 %v84, 1e-24
  %v105 = vmax.f32 %v87, 1e-24
  %v106 = vmax.f32 %v90, 1e-24
  %v107 = vrsqrt.pop %v91
  %v108 = vmul.f32 %v107, %v91
  %v109 = vmul.f32 %v108, %v107
  %v110 = vmul.f32 0.5, %v109
  %v111 = vsub.f32 1.5, %v110
  %v112 = vmul.f32 %v107, %v111
  %vm113 = vweird.f32 %v91
  %vm114 = vweird.f32 %v107
  %vm115 = vmor %vm113, %vm114
  %v116 = vsel %vm115, %v107, %v112
  %v117 = vrsqrt.pop %v92
  %v118 = vmul.f32 %v117, %v92
  %v119 = vmul.f32 %v118, %v117
  %v120 = vmul.f32 0.5, %v119
  %v121 = vsub.f32 1.5, %v120
  %v122 = vmul.f32 %v117, %v121
  %vm123 = vweird.f32 %v92
  %vm124 = vweird.f32 %v117
  %vm125 = vmor %vm123, %vm124
  %v126 = vsel %vm125, %v117, %v122
  %v127 = vrsqrt.pop %v93
  %v128 = vmul.f32 %v127, %v93
  %v129 = vmul.f32 %v128, %v127
  %v130 = vmul.f32 0.5, %v129
  %v131 = vsub.f32 1.5, %v130
  %v132 = vmul.f32 %v127, %v131
  %vm133 = vweird.f32 %v93
  %vm134 = vweird.f32 %v127
  %vm135 = vmor %vm133, %vm134
  %v136 = vsel %vm135, %v127, %v132
  %v137 = vrsqrt.pop %v94
  %v138 = vmul.f32 %v137, %v94
  %v139 = vmul.f32 %v138, %v137
  %v140 = vmul.f32 0.5, %v139
  %v141 = vsub.f32 1.5, %v140
  %v142 = vmul.f32 %v137, %v141
  %vm143 = vweird.f32 %v94
  %vm144 = vweird.f32 %v137
  %vm145 = vmor %vm143, %vm144
  %v146 = vsel %vm145, %v137, %v142
  %v147 = vrsqrt.pop %v95
  %v148 = vmul.f32 %v147, %v95
  %v149 = vmul.f32 %v148, %v147
  %v150 = vmul.f32 0.5, %v149
  %v151 = vsub.f32 1.5, %v150
  %v152 = vmul.f32 %v147, %v151
  %vm153 = vweird.f32 %v95
  %vm154 = vweird.f32 %v147
  %vm155 = vmor %vm153, %vm154
  %v156 = vsel %vm155, %v147, %v152
  %v157 = vrsqrt.pop %v96
  %v158 = vmul.f32 %v157, %v96
  %v159 = vmul.f32 %v158, %v157
  %v160 = vmul.f32 0.5, %v159
  %v161 = vsub.f32 1.5, %v160
  %v162 = vmul.f32 %v157, %v161
  %vm163 = vweird.f32 %v96
  %vm164 = vweird.f32 %v157
  %vm165 = vmor %vm163, %vm164
  %v166 = vsel %vm165, %v157, %v162
  %v167 = vrsqrt.pop %v97
  %v168 = vmul.f32 %v167, %v97
  %v169 = vmul.f32 %v168, %v167
  %v170 = vmul.f32 0.5, %v169
  %v171 = vsub.f32 1.5, %v170
  %v172 = vmul.f32 %v167, %v171
  %vm173 = vweird.f32 %v97
  %vm174 = vweird.f32 %v167
  %vm175 = vmor %vm173, %vm174
  %v176 = vsel %vm175, %v167, %v172
  %v177 = vrsqrt.pop %v98
  %v178 = vmul.f32 %v177, %v98
  %v179 = vmul.f32 %v178, %v177
  %v180 = vmul.f32 0.5, %v179
  %v181 = vsub.f32 1.5, %v180
  %v182 = vmul.f32 %v177, %v181
  %vm183 = vweird.f32 %v98
  %vm184 = vweird.f32 %v177
  %vm185 = vmor %vm183, %vm184
  %v186 = vsel %vm185, %v177, %v182
  %v187 = vrsqrt.pop %v99
  %v188 = vmul.f32 %v187, %v99
  %v189 = vmul.f32 %v188, %v187
  %v190 = vmul.f32 0.5, %v189
  %v191 = vsub.f32 1.5, %v190
  %v192 = vmul.f32 %v187, %v191
  %vm193 = vweird.f32 %v99
  %vm194 = vweird.f32 %v187
  %vm195 = vmor %vm193, %vm194
  %v196 = vsel %vm195, %v187, %v192
  %v197 = vrsqrt.pop %v100
  %v198 = vmul.f32 %v197, %v100
  %v199 = vmul.f32 %v198, %v197
  %v200 = vmul.f32 0.5, %v199
  %v201 = vsub.f32 1.5, %v200
  %v202 = vmul.f32 %v197, %v201
  %vm203 = vweird.f32 %v100
  %vm204 = vweird.f32 %v197
  %vm205 = vmor %vm203, %vm204
  %v206 = vsel %vm205, %v197, %v202
  %v207 = vrsqrt.pop %v101
  %v208 = vmul.f32 %v207, %v101
  %v209 = vmul.f32 %v208, %v207
  %v210 = vmul.f32 0.5, %v209
  %v211 = vsub.f32 1.5, %v210
  %v212 = vmul.f32 %v207, %v211
  %vm213 = vweird.f32 %v101
  %vm214 = vweird.f32 %v207
  %vm215 = vmor %vm213, %vm214
  %v216 = vsel %vm215, %v207, %v212
  %v217 = vrsqrt.pop %v102
  %v218 = vmul.f32 %v217, %v102
  %v219 = vmul.f32 %v218, %v217
  %v220 = vmul.f32 0.5, %v219
  %v221 = vsub.f32 1.5, %v220
  %v222 = vmul.f32 %v217, %v221
  %vm223 = vweird.f32 %v102
  %vm224 = vweird.f32 %v217
  %vm225 = vmor %vm223, %vm224
  %v226 = vsel %vm225, %v217, %v222
  %v227 = vrsqrt.pop %v103
  %v228 = vmul.f32 %v227, %v103
  %v229 = vmul.f32 %v228, %v227
  %v230 = vmul.f32 0.5, %v229
  %v231 = vsub.f32 1.5, %v230
  %v232 = vmul.f32 %v227, %v231
  %vm233 = vweird.f32 %v103
  %vm234 = vweird.f32 %v227
  %vm235 = vmor %vm233, %vm234
  %v236 = vsel %vm235, %v227, %v232
  %v237 = vrsqrt.pop %v104
  %v238 = vmul.f32 %v237, %v104
  %v239 = vmul.f32 %v238, %v237
  %v240 = vmul.f32 0.5, %v239
  %v241 = vsub.f32 1.5, %v240
  %v242 = vmul.f32 %v237, %v241
  %vm243 = vweird.f32 %v104
  %vm244 = vweird.f32 %v237
  %vm245 = vmor %vm243, %vm244
  %v246 = vsel %vm245, %v237, %v242
  %v247 = vrsqrt.pop %v105
  %v248 = vmul.f32 %v247, %v105
  %v249 = vmul.f32 %v248, %v247
  %v250 = vmul.f32 0.5, %v249
  %v251 = vsub.f32 1.5, %v250
  %v252 = vmul.f32 %v247, %v251
  %vm253 = vweird.f32 %v105
  %vm254 = vweird.f32 %v247
  %vm255 = vmor %vm253, %vm254
  %v256 = vsel %vm255, %v247, %v252
  %v257 = vrsqrt.pop %v106
  %v258 = vmul.f32 %v257, %v106
  %v259 = vmul.f32 %v258, %v257
  %v260 = vmul.f32 0.5, %v259
  %v261 = vsub.f32 1.5, %v260
  %v262 = vmul.f32 %v257, %v261
  %vm263 = vweird.f32 %v106
  %vm264 = vweird.f32 %v257
  %vm265 = vmor %vm263, %vm264
  %v266 = vsel %vm265, %v257, %v262
  %v267 = vmul.f32 %v10, %v116
  %v268 = vmul.f32 %v11, %v126
  %v269 = vmul.f32 %v12, %v136
  %v270 = vmul.f32 %v13, %v146
  %v271 = vmul.f32 %v14, %v156
  %v272 = vmul.f32 %v15, %v166
  %v273 = vmul.f32 %v16, %v176
  %v274 = vmul.f32 %v17, %v186
  %v275 = vmul.f32 %v18, %v196
  %v276 = vmul.f32 %v19, %v206
  %v277 = vmul.f32 %v20, %v216
  %v278 = vmul.f32 %v21, %v226
  %v279 = vmul.f32 %v22, %v236
  %v280 = vmul.f32 %v23, %v246
  %v281 = vmul.f32 %v24, %v256
  %v282 = vmul.f32 %v25, %v266
  %v283 = vpack.c.bf16 %v267, %v267
  %v284 = vpack.c.bf16 %v268, %v268
  %v285 = vpack.c.bf16 %v269, %v269
  %v286 = vpack.c.bf16 %v270, %v270
  %v287 = vpack.c.bf16 %v271, %v271
  %v288 = vpack.c.bf16 %v272, %v272
  %v289 = vpack.c.bf16 %v273, %v273
  %v290 = vpack.c.bf16 %v274, %v274
  %v291 = vpack.c.bf16 %v275, %v275
  %v292 = vpack.c.bf16 %v276, %v276
  %v293 = vpack.c.bf16 %v277, %v277
  %v294 = vpack.c.bf16 %v278, %v278
  %v295 = vpack.c.bf16 %v279, %v279
  %v296 = vpack.c.bf16 %v280, %v280
  %v297 = vpack.c.bf16 %v281, %v281
  %v298 = vpack.c.bf16 %v282, %v282
  %vm299 = vcmask 257024
  %300 = vst.msk [vmem:[%s1] sm:$0xf] %vm299, %v283
  %301 = vst.msk [vmem:[%s1 + $0x4] sm:$0xf] %vm299, %v284
  %302 = vst.msk [vmem:[%s1 + $0x8] sm:$0xf] %vm299, %v285
  %303 = vst.msk [vmem:[%s1 + $0xc] sm:$0xf] %vm299, %v286
  %304 = vst.msk [vmem:[%s1 + $0x10] sm:$0xf] %vm299, %v287
  %305 = vst.msk [vmem:[%s1 + $0x14] sm:$0xf] %vm299, %v288
  %306 = vst.msk [vmem:[%s1 + $0x18] sm:$0xf] %vm299, %v289
  %307 = vst.msk [vmem:[%s1 + $0x1c] sm:$0xf] %vm299, %v290
  %308 = vst.msk [vmem:[%s1 + $0x20] sm:$0xf] %vm299, %v291
  %309 = vst.msk [vmem:[%s1 + $0x24] sm:$0xf] %vm299, %v292
  %310 = vst.msk [vmem:[%s1 + $0x28] sm:$0xf] %vm299, %v293
  %311 = vst.msk [vmem:[%s1 + $0x2c] sm:$0xf] %vm299, %v294
  %312 = vst.msk [vmem:[%s1 + $0x30] sm:$0xf] %vm299, %v295
  %313 = vst.msk [vmem:[%s1 + $0x34] sm:$0xf] %vm299, %v296
  %314 = vst.msk [vmem:[%s1 + $0x38] sm:$0xf] %vm299, %v297
  %315 = vst.msk [vmem:[%s1 + $0x3c] sm:$0xf] %vm299, %v298
  %v316 = vmul.f32 %v267, 2.0
  %v317 = vmul.f32 %v268, 2.0
  %v318 = vmul.f32 %v269, 2.0
  %v319 = vmul.f32 %v270, 2.0
  %v320 = vmul.f32 %v271, 2.0
  %v321 = vmul.f32 %v272, 2.0
  %v322 = vmul.f32 %v273, 2.0
  %v323 = vmul.f32 %v274, 2.0
  %v324 = vmul.f32 %v275, 2.0
  %v325 = vmul.f32 %v276, 2.0
  %v326 = vmul.f32 %v277, 2.0
  %v327 = vmul.f32 %v278, 2.0
  %v328 = vmul.f32 %v279, 2.0
  %v329 = vmul.f32 %v280, 2.0
  %v330 = vmul.f32 %v281, 2.0
  %v331 = vmul.f32 %v282, 2.0
  %v332 = vpack.c.bf16 %v316, %v316
  %v333 = vpack.c.bf16 %v317, %v317
  %v334 = vpack.c.bf16 %v318, %v318
  %v335 = vpack.c.bf16 %v319, %v319
  %v336 = vpack.c.bf16 %v320, %v320
  %v337 = vpack.c.bf16 %v321, %v321
  %v338 = vpack.c.bf16 %v322, %v322
  %v339 = vpack.c.bf16 %v323, %v323
  %v340 = vpack.c.bf16 %v324, %v324
  %v341 = vpack.c.bf16 %v325, %v325
  %v342 = vpack.c.bf16 %v326, %v326
  %v343 = vpack.c.bf16 %v327, %v327
  %v344 = vpack.c.bf16 %v328, %v328
  %v345 = vpack.c.bf16 %v329, %v329
  %v346 = vpack.c.bf16 %v330, %v330
  %v347 = vpack.c.bf16 %v331, %v331
  %348 = vst.msk [vmem:[%s2] sm:$0xf] %vm299, %v332
  %349 = vst.msk [vmem:[%s2 + $0x4] sm:$0xf] %vm299, %v333
  %350 = vst.msk [vmem:[%s2 + $0x8] sm:$0xf] %vm299, %v334
  %351 = vst.msk [vmem:[%s2 + $0xc] sm:$0xf] %vm299, %v335
  %352 = vst.msk [vmem:[%s2 + $0x10] sm:$0xf] %vm299, %v336
  %353 = vst.msk [vmem:[%s2 + $0x14] sm:$0xf] %vm299, %v337
  %354 = vst.msk [vmem:[%s2 + $0x18] sm:$0xf] %vm299, %v338
  %355 = vst.msk [vmem:[%s2 + $0x1c] sm:$0xf] %vm299, %v339
  %356 = vst.msk [vmem:[%s2 + $0x20] sm:$0xf] %vm299, %v340
  %357 = vst.msk [vmem:[%s2 + $0x24] sm:$0xf] %vm299, %v341
  %358 = vst.msk [vmem:[%s2 + $0x28] sm:$0xf] %vm299, %v342
  %359 = vst.msk [vmem:[%s2 + $0x2c] sm:$0xf] %vm299, %v343
  %360 = vst.msk [vmem:[%s2 + $0x30] sm:$0xf] %vm299, %v344
  %361 = vst.msk [vmem:[%s2 + $0x34] sm:$0xf] %vm299, %v345
  %362 = vst.msk [vmem:[%s2 + $0x38] sm:$0xf] %vm299, %v346
  %363 = vst.msk [vmem:[%s2 + $0x3c] sm:$0xf] %vm299, %v347
  // Predicated region
  $region6: #{tpu_custom_call.1} parent=0 // pred_check
    _
  $region7: #{tpu_custom_call.1} parent=0 // pred_check_branch
    %365 = sbr.rel (0) target = $region9
  $region8: #{tpu_custom_call.1} parent=0 // pred_region
    _
  $region9: #{tpu_custom_call.1} parent=0 // pred_fallthru
    _
  // Predicated region
  $region10: #{tpu_custom_call.1} parent=0 // pred_check
    _
  $region11: #{tpu_custom_call.1} parent=0 // pred_check_branch
    %367 = sbr.rel (0) target = $region13
  $region12: #{tpu_custom_call.1} parent=0 // pred_region
    _
  $region13: #{tpu_custom_call.1} parent=0 // pred_fallthru
    _
  // Predicated region
  $region14: #{tpu_custom_call.1} parent=0 // pred_check
    _
  $region15: #{tpu_custom_call.1} parent=0 // pred_check_branch
    %369 = sbr.rel (0) target = $region17
  $region16: #{tpu_custom_call.1} parent=0 // pred_region
    _
  $region17: #{tpu_custom_call.1} parent=0 // pred_fallthru
    _
  // Predicated region
  $region18: #{tpu_custom_call.1} parent=0 // pred_check
    _
  $region19: #{tpu_custom_call.1} parent=0 // pred_check_branch
    %371 = sbr.rel (0) target = $region21
  $region20: #{tpu_custom_call.1} parent=0 // pred_region
    _
  $region21: #{tpu_custom_call.1} parent=0 // pred_fallthru
    _

</llo_original>
